<compile_context>
chip_gen: v6e
topology: v6e:2x2x1
jax: 0.10.0
libtpu: 0.0.40
codegen_flags: <defaults>
</compile_context>

<pallas_src>
import math

import jax
import jax.numpy as jnp
from jax import lax
from jax.experimental import pallas as pl
from jax.experimental.pallas import tpu as pltpu


def _self_attention_kernel(x_ref, wqkv_ref, o_ref):
    # x_ref:    (Bb, T, C)   compute dtype (bf16)
    # wqkv_ref: (C, 3H)      compute dtype (bf16), [Wq | Wk | Wv] along lanes
    # o_ref:    (Bb, T*H)    output dtype (f32), lane-dense
    Bb, T, C = x_ref.shape
    H = wqkv_ref.shape[1] // 3

    # ---- fused QKV projection: one wide MXU pass ------------------------
    x2d = x_ref[...].reshape(Bb * T, C)                                  # (Bb*T, C)
    qkv = jnp.dot(x2d, wqkv_ref[...],
                  preferred_element_type=jnp.float32)                    # (Bb*T, 3H) f32
    qkv = qkv.reshape(Bb, T, 3 * H)
    q = qkv[:, :, :H]
    k = qkv[:, :, H:2 * H]
    v = qkv[:, :, 2 * H:]

    # ---- scaled dot product (scale = 1/sqrt(C), matching the module) ----
    scale = 1.0 / math.sqrt(C)
    # Contract last dims directly (no explicit transpose of K); bf16 MXU,
    # f32 accumulation.
    s = jnp.einsum('bqd,bkd->bqk',
                   q.astype(jnp.bfloat16), k.astype(jnp.bfloat16),
                   preferred_element_type=jnp.float32) * scale           # (Bb, T, T)

    # ---- causal mask -----------------------------------------------------
    row = lax.broadcasted_iota(jnp.int32, (T, T), 0)
    col = lax.broadcasted_iota(jnp.int32, (T, T), 1)
    causal = (col <= row)[None, :, :]                                    # (1, T, T)
    s = jnp.where(causal, s, -jnp.inf)

    # ---- softmax (kept in f32) -------------------------------------------
    m = jnp.max(s, axis=-1, keepdims=True)
    p = jnp.exp(s - m)
    denom = jnp.sum(p, axis=-1, keepdims=True)
    p = p * pl.reciprocal(denom, approx=True)

    # ---- attention output -------------------------------------------------
    out = jnp.einsum('bqk,bkd->bqd',
                     p.astype(jnp.bfloat16), v.astype(jnp.bfloat16),
                     preferred_element_type=jnp.float32)                 # (Bb, T, H)

    # lane-dense store: (Bb, T*H)
    o_ref[...] = out.reshape(Bb, T * H).astype(o_ref.dtype)


def self_attention(x, wq, wk, wv, *, batch_block=8,
                   compute_dtype=jnp.bfloat16):
    """x: (B, T, C); wq/wk/wv: (C, H) -> (B, T, H) in x.dtype."""
    B, T, C = x.shape
    H = wq.shape[1]
    out_dtype = x.dtype

    # Fuse the three projections into one (C, 3H) weight; cast inputs to the
    # compute dtype wrapper-side to halve HBM/VMEM traffic.
    wqkv = jnp.concatenate([wq, wk, wv], axis=1).astype(compute_dtype)   # (C, 3H)
    x_c = x.astype(compute_dtype)

    # Batch-block size: as large as possible (<= batch_block) that divides B.
    bb = min(batch_block, B)
    while B % bb:
        bb -= 1
    grid = (B // bb,)

    out_flat = pl.pallas_call(
        _self_attention_kernel,
        out_shape=jax.ShapeDtypeStruct((B, T * H), out_dtype),
        grid_spec=pltpu.PrefetchScalarGridSpec(
            num_scalar_prefetch=0,
            grid=grid,
            in_specs=[
                pl.BlockSpec((bb, T, C), lambda b: (b, 0, 0)),
                pl.BlockSpec((C, 3 * H), lambda b: (0, 0)),
            ],
            out_specs=pl.BlockSpec((bb, T * H), lambda b: (b, 0)),
        ),
        compiler_params=pltpu.CompilerParams(
            dimension_semantics=("parallel",)),
    )(x_c, wqkv)

    return out_flat.reshape(B, T, H)


def self_attention_ref(x, wq, wk, wv):
    """Pure-JAX f32 reference mirroring the PyTorch forward exactly."""
    B, T, C = x.shape
    q = x @ wq
    k = x @ wk
    v = x @ wv
    s = (q @ jnp.swapaxes(k, 1, 2)) / (C ** 0.5)
    mask = jnp.tril(jnp.ones((T, T)))
    s = jnp.where(mask == 0, -jnp.inf, s)
    p = jax.nn.softmax(s, axis=-1)
    return p @ v


if __name__ == "__main__":
    # Small shapes consistent with the module: B=2, T=8 (context), C=32, H=16
    B, T, C, H = 2, 8, 32, 16

    key = jax.random.PRNGKey(0)
    kx, kq, kk, kv = jax.random.split(key, 4)

    x = jax.random.normal(kx, (B, T, C), dtype=jnp.float32)

    # nn.Linear default init: U(-1/sqrt(fan_in), 1/sqrt(fan_in)); stored as (C, H)
    bound = 1.0 / math.sqrt(C)
    wq = jax.random.uniform(kq, (C, H), jnp.float32, -bound, bound)
    wk = jax.random.uniform(kk, (C, H), jnp.float32, -bound, bound)
    wv = jax.random.uniform(kv, (C, H), jnp.float32, -bound, bound)

    out = self_attention(x, wq, wk, wv)
    out = jax.block_until_ready(out)

    ref = self_attention_ref(x, wq, wk, wv)
    assert out.shape == (B, T, H)
    # bf16 matmuls with f32 accumulation: loose-but-safe tolerance vs f32 ref.
    assert jnp.allclose(out, ref, atol=2e-2, rtol=2e-2), "mismatch vs reference"

    print("KERNEL_OK")
</pallas_src>

<mosaic_0001>
module attributes {stable_mosaic.version = 11 : i64} {
  func.func @_self_attention_kernel(%arg0: i32, %arg1: memref<2x8x32xbf16, #tpu.memory_space<vmem>>, %arg2: memref<32x48xbf16, #tpu.memory_space<vmem>>, %arg3: memref<2x128xf32, #tpu.memory_space<vmem>>) attributes {dimension_semantics = [#tpu.dimension_semantics<parallel>], iteration_bounds = array<i64: 1>, scalar_prefetch = 0 : i64, scratch_operands = 0 : i64, tpu.core_type = #tpu.core_type<tc>, window_params = [{transform_indices = @transform_0, window_bounds = array<i64: 2, 8, 32>}, {pipeline_mode = #tpu.pipeline_mode<synchronous>, transform_indices = @transform_1, window_bounds = array<i64: 32, 48>}, {transform_indices = @transform_2, window_bounds = array<i64: 2, 128>}]} {
    %c0 = arith.constant 0 : index
    %c0_0 = arith.constant 0 : index
    %c0_1 = arith.constant 0 : index
    %0 = vector.load %arg1[%c0, %c0_0, %c0_1] : memref<2x8x32xbf16, #tpu.memory_space<vmem>>, vector<2x8x32xbf16>
    %1 = vector.shape_cast %0 : vector<2x8x32xbf16> to vector<16x32xbf16>
    %c0_2 = arith.constant 0 : index
    %c0_3 = arith.constant 0 : index
    %2 = vector.load %arg2[%c0_2, %c0_3] : memref<32x48xbf16, #tpu.memory_space<vmem>>, vector<32x48xbf16>
    %cst = arith.constant dense<0.000000e+00> : vector<16x48xf32>
    %3 = tpu.matmul %1, %2, %cst {dimension_numbers = #tpu.dot_dimension_numbers<[1], [0], [0], [1], [0, 0, 1, 1], [], []>} : vector<16x32xbf16>, vector<32x48xbf16>, vector<16x48xf32> -> vector<16x48xf32>
    %4 = vector.shape_cast %3 : vector<16x48xf32> to vector<2x8x48xf32>
    %5 = vector.extract_strided_slice %4 {offsets = [0, 0, 0], sizes = [2, 8, 16], strides = [1, 1, 1]} : vector<2x8x48xf32> to vector<2x8x16xf32>
    %6 = vector.extract_strided_slice %4 {offsets = [0, 0, 16], sizes = [2, 8, 16], strides = [1, 1, 1]} : vector<2x8x48xf32> to vector<2x8x16xf32>
    %7 = vector.extract_strided_slice %4 {offsets = [0, 0, 32], sizes = [2, 8, 16], strides = [1, 1, 1]} : vector<2x8x48xf32> to vector<2x8x16xf32>
    %8 = arith.truncf %5 : vector<2x8x16xf32> to vector<2x8x16xbf16>
    %9 = arith.truncf %6 : vector<2x8x16xf32> to vector<2x8x16xbf16>
    "tpu.trace_start"() <{level = 10 : i32, message = "bqd,bkd->bqk"}> : () -> ()
    %cst_4 = arith.constant dense<0.000000e+00> : vector<2x8x8xf32>
    %10 = tpu.matmul %8, %9, %cst_4 {dimension_numbers = #tpu.dot_dimension_numbers<[2], [2], [1], [1], [0, 0, 0, 1, 1, 1], [0], [0]>} : vector<2x8x16xbf16>, vector<2x8x16xbf16>, vector<2x8x8xf32> -> vector<2x8x8xf32>
    "tpu.trace_stop"() : () -> ()
    %cst_5 = arith.constant 0.176776692 : f32
    %11 = vector.broadcast %cst_5 : f32 to vector<2x8x8xf32>
    %12 = arith.mulf %10, %11 : vector<2x8x8xf32>
    %13 = tpu.iota {dimensions = array<i32: 0>} : vector<8x8xi32>
    %14 = tpu.iota {dimensions = array<i32: 1>} : vector<8x8xi32>
    %15 = arith.cmpi sle, %14, %13 : vector<8x8xi32>
    %16 = vector.shape_cast %15 : vector<8x8xi1> to vector<1x8x8xi1>
    %cst_6 = arith.constant 0xFF800000 : f32
    %17 = vector.shape_cast %16 : vector<1x8x8xi1> to vector<1x8x8xi1>
    %18 = vector.broadcast %17 : vector<1x8x8xi1> to vector<2x8x8xi1>
    %19 = vector.broadcast %cst_6 : f32 to vector<2x8x8xf32>
    %20 = arith.select %18, %12, %19 : vector<2x8x8xi1>, vector<2x8x8xf32>
    %cst_7 = arith.constant dense<0xFF800000> : vector<2x8xf32>
    %21 = vector.multi_reduction <maximumf>, %20, %cst_7 [2] : vector<2x8x8xf32> to vector<2x8xf32>
    %22 = vector.shape_cast %21 : vector<2x8xf32> to vector<2x8x1xf32>
    %23 = vector.broadcast %22 : vector<2x8x1xf32> to vector<2x8x8xf32>
    %24 = arith.subf %20, %23 : vector<2x8x8xf32>
    %25 = math.exp %24 : vector<2x8x8xf32>
    %cst_8 = arith.constant dense<0.000000e+00> : vector<2x8xf32>
    %26 = vector.multi_reduction <add>, %25, %cst_8 [2] : vector<2x8x8xf32> to vector<2x8xf32>
    %27 = vector.shape_cast %26 : vector<2x8xf32> to vector<2x8x1xf32>
    %28 = tpu.reciprocal %27 {approx = true} : vector<2x8x1xf32> -> vector<2x8x1xf32>
    %29 = vector.broadcast %28 : vector<2x8x1xf32> to vector<2x8x8xf32>
    %30 = arith.mulf %25, %29 : vector<2x8x8xf32>
    %31 = arith.truncf %30 : vector<2x8x8xf32> to vector<2x8x8xbf16>
    %32 = arith.truncf %7 : vector<2x8x16xf32> to vector<2x8x16xbf16>
    "tpu.trace_start"() <{level = 10 : i32, message = "bqk,bkd->bqd"}> : () -> ()
    %cst_9 = arith.constant dense<0.000000e+00> : vector<2x8x16xf32>
    %33 = tpu.matmul %31, %32, %cst_9 {dimension_numbers = #tpu.dot_dimension_numbers<[2], [1], [1], [2], [0, 0, 0, 1, 1, 2], [0], [0]>} : vector<2x8x8xbf16>, vector<2x8x16xbf16>, vector<2x8x16xf32> -> vector<2x8x16xf32>
    "tpu.trace_stop"() : () -> ()
    %34 = vector.shape_cast %33 : vector<2x8x16xf32> to vector<2x128xf32>
    %c0_10 = arith.constant 0 : index
    %c0_11 = arith.constant 0 : index
    %35 = vector.load %arg3[%c0_10, %c0_11] : memref<2x128xf32, #tpu.memory_space<vmem>>, vector<2x128xf32>
    tpu.vector_store %arg3[%c0_10, %c0_11], %34 {strides = array<i32>} : memref<2x128xf32, #tpu.memory_space<vmem>>, vector<2x128xf32>,
    return
  }
  func.func @transform_0(%arg0: i32) -> (i32, i32, i32) {
    %c0_i32 = arith.constant 0 : i32
    %c0_i32_0 = arith.constant 0 : i32
    %c0_i32_1 = arith.constant 0 : i32
    return %arg0, %c0_i32, %c0_i32_0 : i32, i32, i32
  }
  func.func @transform_1(%arg0: i32) -> (i32, i32) {
    %c0_i32 = arith.constant 0 : i32
    %c0_i32_0 = arith.constant 0 : i32
    %c0_i32_1 = arith.constant 0 : i32
    return %c0_i32, %c0_i32_0 : i32, i32
  }
  func.func @transform_2(%arg0: i32) -> (i32, i32) {
    %c0_i32 = arith.constant 0 : i32
    %c0_i32_0 = arith.constant 0 : i32
    return %arg0, %c0_i32 : i32, i32
  }
}

</mosaic_0001>

<llo_original>
// kernel: tpu_custom_call.1
$region0: #{tpu_custom_call.1}
  #allocation0 [shape = 'u32[]', space=smem, size = 0x4, offset = 0x4, fixed_abs, tag = 'smem constant byte address 0x4 - core index']
  #allocation1 [shape = 'u32[144,128]{1,0:T(1,128)}', space=vmem, size = 0x12000, scoped, tag = 'internal scratch']
  %s0 = inlined_call_operand.hbm [shape: bf16[2,8,32], index: 0, kind: input, shape index: {}]
  %s1 = inlined_call_operand.hbm [shape: bf16[32,48], index: 1, kind: input, shape index: {}]
  %s2 = inlined_call_operand.hbm [shape: f32[2,128], index: 2, kind: output, shape index: {}]
  %s3 = sld [smem:[#allocation0]]
  $region26: #{tpu_custom_call.1} parent=0
    _
  %s5 = ssub.s32 1, %s3
  %s6 = scalar_select 0, %s5, %s3
  $region1: #{tpu_custom_call.1} parent=0
    #allocation2 [shape = 'u8[4096]{0}', space=vmem, size = 0x1000, scoped, tag = 'input window, operand 0, single buffered']
    #allocation3 [shape = 's32[1]{0}', space=sflag, size = 0x4, scoped, tag = 'scoped memory for tpu_custom_call.1']
    #allocation4 [shape = 's32[1]{0}', space=sflag, size = 0x4, scoped, tag = 'scoped memory for tpu_custom_call.1']
    #allocation5 [shape = 'u8[8192]{0}', space=vmem, size = 0x2000, scoped, tag = 'input window, operand 1, single buffered']
    #allocation6 [shape = 's32[1]{0}', space=sflag, size = 0x4, scoped, tag = 'scoped memory for tpu_custom_call.1']
    #allocation7 [shape = 'u8[1024]{0}', space=vmem, size = 0x400, scoped, tag = 'output window, operand 0, single buffered']
    %7 = vsyncpa [#allocation3], 0
    %8 = vsyncpa [#allocation6], 0
    %9 = vsyncpa [#allocation4], 0
    // Predicated region
    $region2: #{tpu_custom_call.1} parent=1 // pred_check
      _
    $region3: #{tpu_custom_call.1} parent=1 // pred_check_branch
      %11 = sbr.rel (0) target = $region5
    $region4: #{tpu_custom_call.1} parent=1 // pred_region
      %s13 = ssub.s32 128, 128
      %14 = vsyncadd [#allocation3], %s13
      %s15 = sshll.u32 [#allocation2], 4
      %s16 = int_to_ptr.vmem [resolvable:$true] %s15
      %21 = dma.hbm_to_vmem [thread:$0]  %s0, 128, %s16, [#allocation3], 64, 64, 4
    $region5: #{tpu_custom_call.1} parent=1 // pred_fallthru
      _
    // Predicated region
    $region6: #{tpu_custom_call.1} parent=1 // pred_check
      _
    $region7: #{tpu_custom_call.1} parent=1 // pred_check_branch
      %23 = sbr.rel (0) target = $region9
    $region8: #{tpu_custom_call.1} parent=1 // pred_region
      %s25 = ssub.s32 256, 256
      %26 = vsyncadd [#allocation6], %s25
      %s27 = sshll.u32 [#allocation5], 4
      %s28 = int_to_ptr.vmem [resolvable:$true] %s27
      %33 = dma.hbm_to_vmem [thread:$0]  %s1, 256, %s28, [#allocation6], 64, 64, 4
    $region9: #{tpu_custom_call.1} parent=1 // pred_fallthru
      _
    // Predicated region
    $region10: #{tpu_custom_call.1} parent=1 // pred_check
      _
    $region11: #{tpu_custom_call.1} parent=1 // pred_check_branch
      %35 = sbr.rel (0) target = $region13
    $region12: #{tpu_custom_call.1} parent=1 // pred_region
      %36 = dma.done [#allocation3], 128
    $region13: #{tpu_custom_call.1} parent=1 // pred_fallthru
      _
    // Predicated region
    $region14: #{tpu_custom_call.1} parent=1 // pred_check
      _
    $region15: #{tpu_custom_call.1} parent=1 // pred_check_branch
      %38 = sbr.rel (0) target = $region17
    $region16: #{tpu_custom_call.1} parent=1 // pred_region
      %39 = dma.done [#allocation6], 256
    $region17: #{tpu_custom_call.1} parent=1 // pred_fallthru
      _
    %v41 = vld [vmem:[#allocation2] sm:$0xf]
    %v42 = vld [vmem:[#allocation2 + $0x4] sm:$0xf]
    %v43 = vld [vmem:[#allocation5] sm:$0xf]
    %v44 = vld [vmem:[#allocation5 + $0x4] sm:$0xf]
    %v45 = vld [vmem:[#allocation5 + $0x8] sm:$0xf]
    %v46 = vld [vmem:[#allocation5 + $0xc] sm:$0xf]
    %v49 = vunpack.c.l.b16 %v41
    %v50 = vunpack.c.l.b16 %v42
    %v51 = vpack.c.b16 %v50, %v49
    %v56 = vunpack.c.l.b16 %v43
    %v57 = vunpack.c.l.b16 %v44
    %v58 = vunpack.c.l.b16 %v45
    %v59 = vunpack.c.l.b16 %v46
    %v60 = vpack.c.b16 %v57, %v56
    %v61 = vpack.c.b16 %v59, %v58
    %vm64 = vcmask 261120
    %v66 = vsel %vm64, %v51, 0
    %68 = vmatprep.subr.bf16.mxu0 0
    %69 = vmatpush1.bf16.msra.mxu0 0
    %70 = vmatprep.subr.bf16.mxu0 0
    %71 = vmatpush1.bf16.msra.mxu0 0
    %72 = vmatprep.subr.bf16.mxu0 0
    %73 = vmatpush1.bf16.msra.mxu0 0
    %74 = vmatprep.subr.bf16.mxu0 0
    %75 = vmatpush1.bf16.msra.mxu0 0
    %76 = vmatprep.subr.bf16.mxu0 0
    %77 = vmatpush1.bf16.msra.mxu0 0
    %78 = vmatprep.subr.bf16.mxu0 0
    %79 = vmatpush1.bf16.msra.mxu0 0
    %80 = vmatprep.subr.bf16.mxu0 0
    %81 = vmatpush1.bf16.msra.mxu0 %v61
    %82 = vmatprep.subr.bf16.mxu0 0
    %83 = vmatpush1.bf16.msra.mxu0 %v60
    %84 = vmatprep.subr.bf16.mxu0 0
    %85 = vmatpush2.bf16.msra.mxu0 0
    %86 = vmatprep.subr.bf16.mxu0 0
    %87 = vmatpush2.bf16.msra.mxu0 0
    %88 = vmatprep.subr.bf16.mxu0 0
    %89 = vmatpush2.bf16.msra.mxu0 0
    %90 = vmatprep.subr.bf16.mxu0 0
    %91 = vmatpush2.bf16.msra.mxu0 0
    %92 = vmatprep.subr.bf16.mxu0 0
    %93 = vmatpush2.bf16.msra.mxu0 0
    %94 = vmatprep.subr.bf16.mxu0 0
    %95 = vmatpush2.bf16.msra.mxu0 0
    %96 = vmatprep.subr.bf16.mxu0 0
    %97 = vmatpush2.bf16.msra.mxu0 0
    %98 = vmatprep.subr.bf16.mxu0 0
    %99 = vmatpush2.bf16.msra.mxu0 0
    %100 = vmatprep.mubr.bf16.mxu0 0
    %101 = vmatmul.mubr.bf16.gmra.mxu0 %v66
    %v102 = vpop.f32.mrf.mxu0
    %v103 = vadd.f32 0.0, %v102
    %v104 = vpop.f32.mrf.mxu0
    %v105 = vpop.f32.mrf.mxu0
    %v106 = vadd.f32 0.0, %v105
    %v107 = vpop.f32.mrf.mxu0
    %108 = vdwg.mxu0
    %v109 = vpack.c.bf16 %v103, %v103
    %v110 = vpack.c.bf16 %v106, %v106
    %112 = vrot.lane.b32.xlu0 %v109, 112
    %v113 = vpop.permute.xlu0 %112
    %vm114 = vcmask 130048
    %v116 = vsel %vm114, %v109, 0
    %v119 = vsel %vm114, %v113, 0
    %121 = vmatprep.subr.bf16.mxu0 0
    %122 = vmatpush1.bf16.xpose.msra.mxu0 0
    %123 = vmatprep.subr.bf16.mxu0 0
    %124 = vmatpush1.bf16.xpose.msra.mxu0 0
    %125 = vmatprep.subr.bf16.mxu0 0
    %126 = vmatpush1.bf16.xpose.msra.mxu0 0
    %127 = vmatprep.subr.bf16.mxu0 0
    %128 = vmatpush1.bf16.xpose.msra.mxu0 0
    %129 = vmatprep.subr.bf16.mxu0 0
    %130 = vmatpush1.bf16.xpose.msra.mxu0 0
    %131 = vmatprep.subr.bf16.mxu0 0
    %132 = vmatpush1.bf16.xpose.msra.mxu0 0
    %133 = vmatprep.subr.bf16.mxu0 0
    %134 = vmatpush1.bf16.xpose.msra.mxu0 0
    %135 = vmatprep.subr.bf16.mxu0 0
    %136 = vmatpush1.bf16.xpose.msra.mxu0 %v119
    %137 = vmatprep.subr.bf16.mxu0 0
    %138 = vmatpush2.bf16.xpose.msra.mxu0 0
    %139 = vmatprep.subr.bf16.mxu0 0
    %140 = vmatpush2.bf16.xpose.msra.mxu0 0
    %141 = vmatprep.subr.bf16.mxu0 0
    %142 = vmatpush2.bf16.xpose.msra.mxu0 0
    %143 = vmatprep.subr.bf16.mxu0 0
    %144 = vmatpush2.bf16.xpose.msra.mxu0 0
    %145 = vmatprep.subr.bf16.mxu0 0
    %146 = vmatpush2.bf16.xpose.msra.mxu0 0
    %147 = vmatprep.subr.bf16.mxu0 0
    %148 = vmatpush2.bf16.xpose.msra.mxu0 0
    %149 = vmatprep.subr.bf16.mxu0 0
    %150 = vmatpush2.bf16.xpose.msra.mxu0 0
    %151 = vmatprep.subr.bf16.mxu0 0
    %152 = vmatpush2.bf16.xpose.msra.mxu0 0
    %153 = vmatprep.mubr.bf16.mxu0 0
    %154 = vmatmul.mubr.bf16.gmra.mxu0 %v116
    %v155 = vpop.f32.mrf.mxu0
    %v156 = vadd.f32 0.0, %v155
    %v157 = vpop.f32.mrf.mxu0
    %v158 = vpop.f32.mrf.mxu0
    %v159 = vpop.f32.mrf.mxu0
    %160 = vdwg.mxu0
    %162 = vrot.lane.b32.xlu0 %v110, 112
    %v163 = vpop.permute.xlu0 %162
    %v165 = vsel %vm114, %v110, 0
    %v168 = vsel %vm114, %v163, 0
    %170 = vmatprep.subr.bf16.mxu0 0
    %171 = vmatpush1.bf16.xpose.msra.mxu0 0
    %172 = vmatprep.subr.bf16.mxu0 0
    %173 = vmatpush1.bf16.xpose.msra.mxu0 0
    %174 = vmatprep.subr.bf16.mxu0 0
    %175 = vmatpush1.bf16.xpose.msra.mxu0 0
    %176 = vmatprep.subr.bf16.mxu0 0
    %177 = vmatpush1.bf16.xpose.msra.mxu0 0
    %178 = vmatprep.subr.bf16.mxu0 0
    %179 = vmatpush1.bf16.xpose.msra.mxu0 0
    %180 = vmatprep.subr.bf16.mxu0 0
    %181 = vmatpush1.bf16.xpose.msra.mxu0 0
    %182 = vmatprep.subr.bf16.mxu0 0
    %183 = vmatpush1.bf16.xpose.msra.mxu0 0
    %184 = vmatprep.subr.bf16.mxu0 0
    %185 = vmatpush1.bf16.xpose.msra.mxu0 %v168
    %186 = vmatprep.subr.bf16.mxu0 0
    %187 = vmatpush2.bf16.xpose.msra.mxu0 0
    %188 = vmatprep.subr.bf16.mxu0 0
    %189 = vmatpush2.bf16.xpose.msra.mxu0 0
    %190 = vmatprep.subr.bf16.mxu0 0
    %191 = vmatpush2.bf16.xpose.msra.mxu0 0
    %192 = vmatprep.subr.bf16.mxu0 0
    %193 = vmatpush2.bf16.xpose.msra.mxu0 0
    %194 = vmatprep.subr.bf16.mxu0 0
    %195 = vmatpush2.bf16.xpose.msra.mxu0 0
    %196 = vmatprep.subr.bf16.mxu0 0
    %197 = vmatpush2.bf16.xpose.msra.mxu0 0
    %198 = vmatprep.subr.bf16.mxu0 0
    %199 = vmatpush2.bf16.xpose.msra.mxu0 0
    %200 = vmatprep.subr.bf16.mxu0 0
    %201 = vmatpush2.bf16.xpose.msra.mxu0 0
    %202 = vmatprep.mubr.bf16.mxu0 0
    %203 = vmatmul.mubr.bf16.gmra.mxu0 %v165
    %v204 = vpop.f32.mrf.mxu0
    %v205 = vadd.f32 0.0, %v204
    %v206 = vpop.f32.mrf.mxu0
    %v207 = vpop.f32.mrf.mxu0
    %v208 = vpop.f32.mrf.mxu0
    %209 = vdwg.mxu0
    %v210 = vmul.f32 %v156, 0.17677669
    %v211 = vmul.f32 %v205, 0.17677669
    %v212 = vlaneseq
    %v213 = vshrl.u32 %v212, 7
    %v214 = vlaneseq
    %v215 = vand.u32 %v214, 127
    %vm216 = vcmp.le.s32.totalorder %v215, %v213
    %v217 = vsel %vm216, 1, 0
    %vm218 = vcmp.eq.s32.totalorder %v217, 1
    %v219 = vsel %vm218, %v210, -inf
    %v220 = vsel %vm218, %v211, -inf
    %vm221 = vcmask 64512
    %v222 = vsel %vm221, %v219, -inf
    %223 = vmax.xlane.f32.xlu0 %v222
    %v224 = vpop.xlane.xlu0 %223
    %v225 = vsel %vm221, %v220, -inf
    %226 = vmax.xlane.f32.xlu0 %v225
    %v227 = vpop.xlane.xlu0 %226
    %v228 = vsub.f32 %v219, %v224
    %v229 = vsub.f32 %v220, %v227
    %v230 = vmul.f32 %v228, 1.442695
    %v231 = vpow.pop %v230
    %v232 = vmul.f32 %v229, 1.442695
    %v233 = vpow.pop %v232
    %v234 = vsel %vm221, %v231, 0.0
    %235 = vadd.xlane.f32.xlu0 %v234
    %v236 = vpop.xlane.xlu0 %235
    %v237 = vsel %vm221, %v233, 0.0
    %238 = vadd.xlane.f32.xlu0 %v237
    %v239 = vpop.xlane.xlu0 %238
    %v240 = vrcp.pop %v236
    %v241 = vrcp.pop %v239
    %v242 = vmul.f32 %v231, %v240
    %v243 = vmul.f32 %v233, %v241
    %v244 = vpack.c.bf16 %v242, %v242
    %v245 = vpack.c.bf16 %v243, %v243
    %246 = vrot.lane.b32.xlu0 %v109, 96
    %v247 = vpop.permute.xlu0 %246
    %v249 = vsel %vm221, %v244, 0
    %vm251 = vcmask 1043456
    %v253 = vsel %vm251, %v247, 0
    %255 = vmatprep.subr.bf16.mxu0 0
    %256 = vmatpush1.bf16.msra.mxu0 0
    %257 = vmatprep.subr.bf16.mxu0 0
    %258 = vmatpush1.bf16.msra.mxu0 0
    %259 = vmatprep.subr.bf16.mxu0 0
    %260 = vmatpush1.bf16.msra.mxu0 0
    %261 = vmatprep.subr.bf16.mxu0 0
    %262 = vmatpush1.bf16.msra.mxu0 0
    %263 = vmatprep.subr.bf16.mxu0 0
    %264 = vmatpush1.bf16.msra.mxu0 0
    %265 = vmatprep.subr.bf16.mxu0 0
    %266 = vmatpush1.bf16.msra.mxu0 0
    %267 = vmatprep.subr.bf16.mxu0 0
    %268 = vmatpush1.bf16.msra.mxu0 0
    %269 = vmatprep.subr.bf16.mxu0 0
    %270 = vmatpush1.bf16.msra.mxu0 %v253
    %271 = vmatprep.subr.bf16.mxu0 0
    %272 = vmatpush2.bf16.msra.mxu0 0
    %273 = vmatprep.subr.bf16.mxu0 0
    %274 = vmatpush2.bf16.msra.mxu0 0
    %275 = vmatprep.subr.bf16.mxu0 0
    %276 = vmatpush2.bf16.msra.mxu0 0
    %277 = vmatprep.subr.bf16.mxu0 0
    %278 = vmatpush2.bf16.msra.mxu0 0
    %279 = vmatprep.subr.bf16.mxu0 0
    %280 = vmatpush2.bf16.msra.mxu0 0
    %281 = vmatprep.subr.bf16.mxu0 0
    %282 = vmatpush2.bf16.msra.mxu0 0
    %283 = vmatprep.subr.bf16.mxu0 0
    %284 = vmatpush2.bf16.msra.mxu0 0
    %285 = vmatprep.subr.bf16.mxu0 0
    %286 = vmatpush2.bf16.msra.mxu0 0
    %287 = vmatprep.mubr.bf16.mxu0 0
    %288 = vmatmul.mubr.bf16.gmra.mxu0 %v249
    %v289 = vpop.f32.mrf.mxu0
    %v290 = vadd.f32 0.0, %v289
    %v291 = vpop.f32.mrf.mxu0
    %v292 = vpop.f32.mrf.mxu0
    %v293 = vpop.f32.mrf.mxu0
    %294 = vdwg.mxu0
    %295 = vrot.lane.b32.xlu0 %v110, 96
    %v296 = vpop.permute.xlu0 %295
    %v298 = vsel %vm221, %v245, 0
    %v301 = vsel %vm251, %v296, 0
    %303 = vmatprep.subr.bf16.mxu0 0
    %304 = vmatpush1.bf16.msra.mxu0 0
    %305 = vmatprep.subr.bf16.mxu0 0
    %306 = vmatpush1.bf16.msra.mxu0 0
    %307 = vmatprep.subr.bf16.mxu0 0
    %308 = vmatpush1.bf16.msra.mxu0 0
    %309 = vmatprep.subr.bf16.mxu0 0
    %310 = vmatpush1.bf16.msra.mxu0 0
    %311 = vmatprep.subr.bf16.mxu0 0
    %312 = vmatpush1.bf16.msra.mxu0 0
    %313 = vmatprep.subr.bf16.mxu0 0
    %314 = vmatpush1.bf16.msra.mxu0 0
    %315 = vmatprep.subr.bf16.mxu0 0
    %316 = vmatpush1.bf16.msra.mxu0 0
    %317 = vmatprep.subr.bf16.mxu0 0
    %318 = vmatpush1.bf16.msra.mxu0 %v301
    %319 = vmatprep.subr.bf16.mxu0 0
    %320 = vmatpush2.bf16.msra.mxu0 0
    %321 = vmatprep.subr.bf16.mxu0 0
    %322 = vmatpush2.bf16.msra.mxu0 0
    %323 = vmatprep.subr.bf16.mxu0 0
    %324 = vmatpush2.bf16.msra.mxu0 0
    %325 = vmatprep.subr.bf16.mxu0 0
    %326 = vmatpush2.bf16.msra.mxu0 0
    %327 = vmatprep.subr.bf16.mxu0 0
    %328 = vmatpush2.bf16.msra.mxu0 0
    %329 = vmatprep.subr.bf16.mxu0 0
    %330 = vmatpush2.bf16.msra.mxu0 0
    %331 = vmatprep.subr.bf16.mxu0 0
    %332 = vmatpush2.bf16.msra.mxu0 0
    %333 = vmatprep.subr.bf16.mxu0 0
    %334 = vmatpush2.bf16.msra.mxu0 0
    %335 = vmatprep.mubr.bf16.mxu0 0
    %336 = vmatmul.mubr.bf16.gmra.mxu0 %v298
    %v337 = vpop.f32.mrf.mxu0
    %v338 = vadd.f32 0.0, %v337
    %v339 = vpop.f32.mrf.mxu0
    %v340 = vpop.f32.mrf.mxu0
    %v341 = vpop.f32.mrf.mxu0
    %342 = vdwg.mxu0
    %v343 = vcombine.high %v290, 0.0
    %v345 = vunpack.c.l.s4 1983009808
    %v346 = vunpack.c.0.s8 %v345
    %v347 = vlaneseq
    %v348 = vshrl.u32 %v347, 7
    %v349 = vsub.s32 %v346, %v348
    %v350 = vrot.slane %v290, %v349
    %v352 = vunpack.c.l.s4 1983009808
    %v353 = vunpack.c.0.s8 %v352
    %v354 = vlaneseq
    %v355 = vshrl.u32 %v354, 7
    %v356 = vsub.s32 %v353, %v355
    %v357 = vrot.slane %v343, %v356
    %v358 = vcombine.high %v338, 0.0
    %v360 = vunpack.c.l.s4 1983009808
    %v361 = vunpack.c.0.s8 %v360
    %v362 = vlaneseq
    %v363 = vshrl.u32 %v362, 7
    %v364 = vsub.s32 %v361, %v363
    %v365 = vrot.slane %v338, %v364
    %v367 = vunpack.c.l.s4 1983009808
    %v368 = vunpack.c.0.s8 %v367
    %v369 = vlaneseq
    %v370 = vshrl.u32 %v369, 7
    %v371 = vsub.s32 %v368, %v370
    %v372 = vrot.slane %v358, %v371
    %v373 = vcombine.low %v350, %v365
    %v374 = vcombine.high %v350, %v365
    %v376 = vunpack.c.l.s4 1934713408
    %v377 = vunpack.c.0.s8 %v376
    %v378 = vlaneseq
    %v379 = vshrl.u32 %v378, 7
    %v380 = vsub.s32 %v377, %v379
    %v381 = vrot.slane %v373, %v380
    %v383 = vunpack.c.l.s4 1934713408
    %v384 = vunpack.c.0.s8 %v383
    %v385 = vlaneseq
    %v386 = vshrl.u32 %v385, 7
    %v387 = vsub.s32 %v384, %v386
    %v388 = vrot.slane %v374, %v387
    %v389 = vcombine.low %v357, %v372
    %v390 = vcombine.high %v357, %v372
    %v392 = vunpack.c.l.s4 1934713408
    %v393 = vunpack.c.0.s8 %v392
    %v394 = vlaneseq
    %v395 = vshrl.u32 %v394, 7
    %v396 = vsub.s32 %v393, %v395
    %v397 = vrot.slane %v389, %v396
    %v399 = vunpack.c.l.s4 1934713408
    %v400 = vunpack.c.0.s8 %v399
    %v401 = vlaneseq
    %v402 = vshrl.u32 %v401, 7
    %v403 = vsub.s32 %v400, %v402
    %v404 = vrot.slane %v390, %v403
    %v405 = vcombine.high %v381, 0.0
    %v406 = vcombine.high %v388, 0.0
    %v407 = vcombine.high %v397, 0.0
    %v408 = vcombine.high %v404, 0.0
    %410 = vrot.lane.b32.xlu0 %v405, 16
    %v411 = vpop.permute.xlu0 %410
    %414 = vrot.lane.b32.xlu0 %v388, 32
    %v415 = vpop.permute.xlu0 %414
    %418 = vrot.lane.b32.xlu0 %v406, 48
    %v419 = vpop.permute.xlu0 %418
    %422 = vrot.lane.b32.xlu0 %v397, 64
    %v423 = vpop.permute.xlu0 %422
    %426 = vrot.lane.b32.xlu0 %v407, 80
    %v427 = vpop.permute.xlu0 %426
    %430 = vrot.lane.b32.xlu0 %v404, 96
    %v431 = vpop.permute.xlu0 %430
    %434 = vrot.lane.b32.xlu0 %v408, 112
    %v435 = vpop.permute.xlu0 %434
    %v437 = vsel %vm114, %v381, %v411
    %v438 = vsel %vm64, %v437, %v415
    %vm439 = vcmask 392192
    %v440 = vsel %vm439, %v438, %v419
    %vm441 = vcmask 523264
    %v442 = vsel %vm441, %v440, %v423
    %vm443 = vcmask 654336
    %v444 = vsel %vm443, %v442, %v427
    %vm445 = vcmask 785408
    %v446 = vsel %vm445, %v444, %v431
    %vm447 = vcmask 916480
    %v448 = vsel %vm447, %v446, %v435
    %449 = vst [vmem:[#allocation7] sm:$0x3] %v448
    // Predicated region
    $region18: #{tpu_custom_call.1} parent=1 // pred_check
      _
    $region19: #{tpu_custom_call.1} parent=1 // pred_check_branch
      %451 = sbr.rel (0) target = $region21
    $region20: #{tpu_custom_call.1} parent=1 // pred_region
      %s453 = ssub.s32 32, 32
      %454 = vsyncadd [#allocation4], %s453
      %s456 = sshll.u32 [#allocation7], 4
      %s457 = int_to_ptr.vmem [resolvable:$true] %s456
      %459 = dma.vmem_to_hbm [thread:$0]  %s457, 32, %s2, [#allocation4]
    $region21: #{tpu_custom_call.1} parent=1 // pred_fallthru
      _
    // Predicated region
    $region22: #{tpu_custom_call.1} parent=1 // pred_check
      _
    $region23: #{tpu_custom_call.1} parent=1 // pred_check_branch
      %461 = sbr.rel (0) target = $region25
    $region24: #{tpu_custom_call.1} parent=1 // pred_region
      %462 = dma.done [#allocation4], 32
    $region25: #{tpu_custom_call.1} parent=1 // pred_fallthru
      _
    %463 = vsyncpa [#allocation3], 1
    %464 = vsyncpa [#allocation6], 1
    %465 = vsyncpa [#allocation4], 1

</llo_original>
